<compile_context>
chip_gen: v5e
topology: v5e:2x2
jax: 0.10.0
libtpu: 0.0.40
codegen_flags: <defaults>
</compile_context>

<pallas_src>
import functools

import jax
import jax.numpy as jnp
from jax.experimental import pallas as pl
from jax.experimental.pallas import tpu as pltpu

N_EMBD = 128
HIDDEN = 4 * N_EMBD
DROPOUT_P = 0.1
# keep element iff uint32 bits >= threshold  =>  P(keep) = 1 - p
_DROP_THRESH = int(DROPOUT_P * (1 << 32))


def _ffwd_kernel(*refs, train):
    if train:
        x_ref, w1_ref, b1_ref, w2_ref, b2_ref, rbits_ref, o_ref = refs
    else:
        x_ref, w1_ref, b1_ref, w2_ref, b2_ref, o_ref = refs

    # Linear 1 (bf16 MXU, f32 accumulate) + bias + ReLU in f32.
    h = jnp.dot(x_ref[...], w1_ref[...], preferred_element_type=jnp.float32)
    h = jnp.maximum(h + b1_ref[...], 0.0)

    # Linear 2 (cast hidden to bf16 for the MXU, accumulate f32) + bias.
    y = jnp.dot(h.astype(jnp.bfloat16), w2_ref[...],
                preferred_element_type=jnp.float32)
    y = y + b2_ref[...]

    if train:
        # Inverted dropout via integer threshold on raw uint32 bits (one vcmp,
        # no int->float convert / shift / multiply).
        keep = rbits_ref[...] >= jnp.uint32(_DROP_THRESH)
        y = jnp.where(keep, y * (1.0 / (1.0 - DROPOUT_P)), 0.0)
    # eval mode: Dropout is identity.

    o_ref[...] = y.astype(o_ref.dtype)


def _round_up(x, m):
    return (x + m - 1) // m * m


def _choose_tm(m, tm):
    """Row tile: large (MXU-friendly), multiple of 16 (bf16 packing), and
    giving >=2 grid steps when possible so the parallel axis can shard across
    both v7x TensorCores."""
    tm = max(16, min(tm, _round_up(m, 16)))
    if m > 16 and _round_up(m, 16) // tm < 2:
        tm = max(16, _round_up((m + 1) // 2, 16))
    return tm


def feed_forward(x, w1, b1, w2, b2, *, train=False, seed=0, tm=512):
    """x: (B, T, n_embd) f32.  w1:(n_embd,4n), b1:(4n,), w2:(4n,n_embd), b2:(n_embd,)."""
    B, T, E = x.shape
    assert E == N_EMBD
    M = B * T
    tm = _choose_tm(M, tm)
    m_pad = _round_up(M, tm)
    grid = (m_pad // tm,)

    # bf16 matmul operands (halves HBM/VMEM traffic, doubles MXU throughput);
    # biases stay f32 for the f32 epilogue.
    x2 = x.reshape(M, E).astype(jnp.bfloat16)
    if m_pad != M:
        x2 = jnp.pad(x2, ((0, m_pad - M), (0, 0)))
    w1b = w1.astype(jnp.bfloat16)
    w2b = w2.astype(jnp.bfloat16)
    b1_2 = b1.reshape(1, HIDDEN).astype(jnp.float32)
    b2_2 = b2.reshape(1, E).astype(jnp.float32)

    row_spec = pl.BlockSpec((tm, E), lambda i: (i, 0))
    in_specs = [
        row_spec,                                      # x tile
        pl.BlockSpec((E, HIDDEN), lambda i: (0, 0)),   # W1 (resident)
        pl.BlockSpec((1, HIDDEN), lambda i: (0, 0)),   # b1
        pl.BlockSpec((HIDDEN, E), lambda i: (0, 0)),   # W2 (resident)
        pl.BlockSpec((1, E), lambda i: (0, 0)),        # b2
    ]
    inputs = [x2, w1b, b1_2, w2b, b2_2]

    if train:
        # Host-side random bits -> works on TPU and in interpret mode.
        rbits = jax.random.bits(jax.random.PRNGKey(seed), (m_pad, E),
                                dtype=jnp.uint32)
        in_specs.append(pl.BlockSpec((tm, E), lambda i: (i, 0)))
        inputs.append(rbits)

    flops = 2 * m_pad * E * HIDDEN * 2  # two matmuls
    bytes_accessed = (x2.size * 2 + w1b.size * 2 + w2b.size * 2
                      + b1_2.size * 4 + b2_2.size * 4
                      + m_pad * E * 4
                      + (m_pad * E * 4 if train else 0))

    out2 = pl.pallas_call(
        functools.partial(_ffwd_kernel, train=train),
        out_shape=jax.ShapeDtypeStruct((m_pad, E), x.dtype),
        grid_spec=pltpu.PrefetchScalarGridSpec(
            num_scalar_prefetch=0,
            grid=grid,
            in_specs=in_specs,
            out_specs=row_spec,
        ),
        compiler_params=pltpu.CompilerParams(
            dimension_semantics=("parallel",),
        ),
        cost_estimate=pl.CostEstimate(
            flops=flops, transcendentals=0, bytes_accessed=bytes_accessed),
    )(*inputs)
    return out2[:M].reshape(B, T, E)


def _init_params(key):
    # nn.Linear default init: U(-1/sqrt(fan_in), 1/sqrt(fan_in)).
    k1, k2, k3, k4 = jax.random.split(key, 4)
    lim1 = 1.0 / jnp.sqrt(N_EMBD)
    lim2 = 1.0 / jnp.sqrt(HIDDEN)
    w1 = jax.random.uniform(k1, (N_EMBD, HIDDEN), jnp.float32, -lim1, lim1)
    b1 = jax.random.uniform(k2, (HIDDEN,), jnp.float32, -lim1, lim1)
    w2 = jax.random.uniform(k3, (HIDDEN, N_EMBD), jnp.float32, -lim2, lim2)
    b2 = jax.random.uniform(k4, (N_EMBD,), jnp.float32, -lim2, lim2)
    return w1, b1, w2, b2


if __name__ == "__main__":
    key = jax.random.PRNGKey(0)
    kx, kp = jax.random.split(key)

    B, T = 2, 8                      # small seq; n_embd fixed at 128 by the module
    x = jax.random.normal(kx, (B, T, N_EMBD), jnp.float32)
    w1, b1, w2, b2 = _init_params(kp)

    # Eval-mode forward (Dropout is identity).
    y = jax.block_until_ready(feed_forward(x, w1, b1, w2, b2, train=False))

    # Pure-JAX f32 reference (loose tolerance for bf16 matmul operands).
    ref = jnp.maximum(x.reshape(-1, N_EMBD) @ w1 + b1, 0.0) @ w2 + b2
    ref = ref.reshape(B, T, N_EMBD)
    assert jnp.allclose(y, ref, atol=3e-2, rtol=3e-2), "mismatch vs JAX reference"

    # Train-mode forward: dropout mask is deterministic (host-side bits), so we
    # can check it exactly against the eval output.
    seed = 123
    y_train = jax.block_until_ready(
        feed_forward(x, w1, b1, w2, b2, train=True, seed=seed))
    M = B * T
    tm_used = _choose_tm(M, 512)
    m_pad = _round_up(M, tm_used)
    rbits = jax.random.bits(jax.random.PRNGKey(seed), (m_pad, N_EMBD),
                            dtype=jnp.uint32)[:M].reshape(B, T, N_EMBD)
    keep = rbits >= jnp.uint32(_DROP_THRESH)
    expected_train = jnp.where(keep, y * (1.0 / (1.0 - DROPOUT_P)), 0.0)
    assert y_train.shape == y.shape
    assert jnp.allclose(y_train, expected_train, atol=1e-5, rtol=1e-5), \
        "train-mode dropout mismatch"

    print("KERNEL_OK")
</pallas_src>

<mosaic_0001>
module attributes {stable_mosaic.version = 11 : i64} {
  func.func @_ffwd_kernel(%arg0: i32, %arg1: memref<16x128xbf16, #tpu.memory_space<vmem>>, %arg2: memref<128x512xbf16, #tpu.memory_space<vmem>>, %arg3: memref<1x512xf32, #tpu.memory_space<vmem>>, %arg4: memref<512x128xbf16, #tpu.memory_space<vmem>>, %arg5: memref<1x128xf32, #tpu.memory_space<vmem>>, %arg6: memref<16x128xf32, #tpu.memory_space<vmem>>) attributes {dimension_semantics = [#tpu.dimension_semantics<parallel>], iteration_bounds = array<i64: 1>, scalar_prefetch = 0 : i64, scratch_operands = 0 : i64, tpu.core_type = #tpu.core_type<tc>, window_params = [{transform_indices = @transform_0, window_bounds = array<i64: 16, 128>}, {pipeline_mode = #tpu.pipeline_mode<synchronous>, transform_indices = @transform_1, window_bounds = array<i64: 128, 512>}, {pipeline_mode = #tpu.pipeline_mode<synchronous>, transform_indices = @transform_2, window_bounds = array<i64: 1, 512>}, {pipeline_mode = #tpu.pipeline_mode<synchronous>, transform_indices = @transform_3, window_bounds = array<i64: 512, 128>}, {pipeline_mode = #tpu.pipeline_mode<synchronous>, transform_indices = @transform_4, window_bounds = array<i64: 1, 128>}, {transform_indices = @transform_5, window_bounds = array<i64: 16, 128>}]} {
    %c0 = arith.constant 0 : index
    %c0_0 = arith.constant 0 : index
    %0 = vector.load %arg1[%c0, %c0_0] : memref<16x128xbf16, #tpu.memory_space<vmem>>, vector<16x128xbf16>
    %c0_1 = arith.constant 0 : index
    %c0_2 = arith.constant 0 : index
    %1 = vector.load %arg2[%c0_1, %c0_2] : memref<128x512xbf16, #tpu.memory_space<vmem>>, vector<128x512xbf16>
    %cst = arith.constant dense<0.000000e+00> : vector<16x512xf32>
    %2 = tpu.matmul %0, %1, %cst {dimension_numbers = #tpu.dot_dimension_numbers<[1], [0], [0], [1], [0, 0, 1, 1], [], []>} : vector<16x128xbf16>, vector<128x512xbf16>, vector<16x512xf32> -> vector<16x512xf32>
    %c0_3 = arith.constant 0 : index
    %c0_4 = arith.constant 0 : index
    %3 = vector.load %arg3[%c0_3, %c0_4] : memref<1x512xf32, #tpu.memory_space<vmem>>, vector<1x512xf32>
    %4 = vector.broadcast %3 : vector<1x512xf32> to vector<16x512xf32>
    %5 = arith.addf %2, %4 : vector<16x512xf32>
    %cst_5 = arith.constant 0.000000e+00 : f32
    %6 = vector.broadcast %cst_5 : f32 to vector<16x512xf32>
    %7 = arith.maximumf %5, %6 : vector<16x512xf32>
    %8 = arith.truncf %7 : vector<16x512xf32> to vector<16x512xbf16>
    %c0_6 = arith.constant 0 : index
    %c0_7 = arith.constant 0 : index
    %9 = vector.load %arg4[%c0_6, %c0_7] : memref<512x128xbf16, #tpu.memory_space<vmem>>, vector<512x128xbf16>
    %cst_8 = arith.constant dense<0.000000e+00> : vector<16x128xf32>
    %10 = tpu.matmul %8, %9, %cst_8 {dimension_numbers = #tpu.dot_dimension_numbers<[1], [0], [0], [1], [0, 0, 1, 1], [], []>} : vector<16x512xbf16>, vector<512x128xbf16>, vector<16x128xf32> -> vector<16x128xf32>
    %c0_9 = arith.constant 0 : index
    %c0_10 = arith.constant 0 : index
    %11 = vector.load %arg5[%c0_9, %c0_10] : memref<1x128xf32, #tpu.memory_space<vmem>>, vector<1x128xf32>
    %12 = vector.broadcast %11 : vector<1x128xf32> to vector<16x128xf32>
    %13 = arith.addf %10, %12 : vector<16x128xf32>
    %c0_11 = arith.constant 0 : index
    %c0_12 = arith.constant 0 : index
    %14 = vector.load %arg6[%c0_11, %c0_12] : memref<16x128xf32, #tpu.memory_space<vmem>>, vector<16x128xf32>
    tpu.vector_store %arg6[%c0_11, %c0_12], %13 {strides = array<i32>} : memref<16x128xf32, #tpu.memory_space<vmem>>, vector<16x128xf32>,
    return
  }
  func.func @transform_0(%arg0: i32) -> (i32, i32) {
    %c0_i32 = arith.constant 0 : i32
    %c0_i32_0 = arith.constant 0 : i32
    return %arg0, %c0_i32 : i32, i32
  }
  func.func @transform_1(%arg0: i32) -> (i32, i32) {
    %c0_i32 = arith.constant 0 : i32
    %c0_i32_0 = arith.constant 0 : i32
    %c0_i32_1 = arith.constant 0 : i32
    return %c0_i32, %c0_i32_0 : i32, i32
  }
  func.func @transform_2(%arg0: i32) -> (i32, i32) {
    %c0_i32 = arith.constant 0 : i32
    %c0_i32_0 = arith.constant 0 : i32
    %c0_i32_1 = arith.constant 0 : i32
    return %c0_i32, %c0_i32_0 : i32, i32
  }
  func.func @transform_3(%arg0: i32) -> (i32, i32) {
    %c0_i32 = arith.constant 0 : i32
    %c0_i32_0 = arith.constant 0 : i32
    %c0_i32_1 = arith.constant 0 : i32
    return %c0_i32, %c0_i32_0 : i32, i32
  }
  func.func @transform_4(%arg0: i32) -> (i32, i32) {
    %c0_i32 = arith.constant 0 : i32
    %c0_i32_0 = arith.constant 0 : i32
    %c0_i32_1 = arith.constant 0 : i32
    return %c0_i32, %c0_i32_0 : i32, i32
  }
  func.func @transform_5(%arg0: i32) -> (i32, i32) {
    %c0_i32 = arith.constant 0 : i32
    %c0_i32_0 = arith.constant 0 : i32
    return %arg0, %c0_i32 : i32, i32
  }
}

</mosaic_0001>

<llo_original>
// kernel: tpu_custom_call.1
$region0: #{tpu_custom_call.1}
  #allocation0 [shape = 'u32[]', space=smem, size = 0x4, offset = 0x4, fixed_abs, tag = 'smem constant byte address 0x4 - core index']
  #allocation1 [shape = 'u32[72,128]{1,0:T(1,128)}', space=vmem, size = 0x9000, scoped, tag = 'internal scratch']
  %s0 = inlined_call_operand.hbm [shape: bf16[16,128], index: 0, kind: input, shape index: {}]
  %s1 = inlined_call_operand.hbm [shape: bf16[128,512], index: 1, kind: input, shape index: {}]
  %s2 = inlined_call_operand.hbm [shape: f32[1,512], index: 2, kind: input, shape index: {}]
  %s3 = inlined_call_operand.hbm [shape: bf16[512,128], index: 3, kind: input, shape index: {}]
  %s4 = inlined_call_operand.vmem [shape: f32[1,128], index: 4, kind: input, shape index: {}]
  %s5 = inlined_call_operand.hbm [shape: f32[16,128], index: 5, kind: output, shape index: {}]
  %s6 = sld [smem:[#allocation0]]
  $region46: #{tpu_custom_call.1} parent=0
    _
  %s8 = ssub.s32 1, %s6
  %s9 = scalar_select 0, %s8, %s6
  $region1: #{tpu_custom_call.1} parent=0
    #allocation2 [shape = 'u8[4096]{0}', space=vmem, size = 0x1000, scoped, tag = 'input window, operand 0, single buffered']
    #allocation3 [shape = 's32[1]{0}', space=sflag, size = 0x4, scoped, tag = 'scoped memory for tpu_custom_call.1']
    #allocation4 [shape = 's32[1]{0}', space=sflag, size = 0x4, scoped, tag = 'scoped memory for tpu_custom_call.1']
    #allocation5 [shape = 'u8[131072]{0}', space=vmem, size = 0x20000, scoped, tag = 'input window, operand 1, single buffered']
    #allocation6 [shape = 's32[1]{0}', space=sflag, size = 0x4, scoped, tag = 'scoped memory for tpu_custom_call.1']
    #allocation7 [shape = 'u8[2048]{0}', space=vmem, size = 0x800, scoped, tag = 'input window, operand 2, single buffered']
    #allocation8 [shape = 'u8[131072]{0}', space=vmem, size = 0x20000, scoped, tag = 'input window, operand 3, single buffered']
    #allocation9 [shape = 's32[1]{0}', space=sflag, size = 0x4, scoped, tag = 'scoped memory for tpu_custom_call.1']
    #allocation10 [shape = 'u8[8192]{0}', space=vmem, size = 0x2000, scoped, tag = 'output window, operand 0, single buffered']
    %10 = vsyncpa [#allocation3], 0
    %11 = vsyncpa [#allocation6], 0
    %12 = vsyncpa [#allocation9], 0
    %13 = vsyncpa [#allocation4], 0
    // Predicated region
    $region2: #{tpu_custom_call.1} parent=1 // pred_check
      _
    $region3: #{tpu_custom_call.1} parent=1 // pred_check_branch
      %15 = sbr.rel (0) target = $region5
    $region4: #{tpu_custom_call.1} parent=1 // pred_region
      %17 = vsyncadd [#allocation3], 0
      %s18 = sshll.u32 %s0, 4
      %s19 = int_to_ptr.hbm [resolvable:$true] %s18
      %s20 = sshll.u32 [#allocation2], 4
      %s21 = int_to_ptr.vmem [resolvable:$true] %s20
      %26 = dma.hbm_to_vmem [thread:$0]  %s19, 128, %s21, [#allocation3], 64, 64, 4
    $region5: #{tpu_custom_call.1} parent=1 // pred_fallthru
      _
    // Predicated region
    $region6: #{tpu_custom_call.1} parent=1 // pred_check
      _
    $region7: #{tpu_custom_call.1} parent=1 // pred_check_branch
      %28 = sbr.rel (0) target = $region9
    $region8: #{tpu_custom_call.1} parent=1 // pred_region
      %30 = vsyncadd [#allocation6], 0
      %s31 = sshll.u32 %s1, 4
      %s32 = int_to_ptr.hbm [resolvable:$true] %s31
      %s33 = sshll.u32 [#allocation5], 4
      %s34 = int_to_ptr.vmem [resolvable:$true] %s33
      %39 = dma.hbm_to_vmem [thread:$0]  %s32, 4096, %s34, [#allocation6], 256, 256, 16
    $region9: #{tpu_custom_call.1} parent=1 // pred_fallthru
      _
    // Predicated region
    $region10: #{tpu_custom_call.1} parent=1 // pred_check
      _
    $region11: #{tpu_custom_call.1} parent=1 // pred_check_branch
      %41 = sbr.rel (0) target = $region13
    $region12: #{tpu_custom_call.1} parent=1 // pred_region
      %43 = vsyncadd [#allocation6], 0
      %s45 = sshll.u32 %s2, 4
      %s46 = int_to_ptr.hbm [resolvable:$true] %s45
      %s47 = sshll.u32 [#allocation7], 4
      %s48 = int_to_ptr.vmem [resolvable:$true] %s47
      %50 = dma.hbm_to_vmem [thread:$0]  %s46, 64, %s48, [#allocation6]
    $region13: #{tpu_custom_call.1} parent=1 // pred_fallthru
      _
    // Predicated region
    $region14: #{tpu_custom_call.1} parent=1 // pred_check
      _
    $region15: #{tpu_custom_call.1} parent=1 // pred_check_branch
      %52 = sbr.rel (0) target = $region17
    $region16: #{tpu_custom_call.1} parent=1 // pred_region
      %54 = vsyncadd [#allocation9], 0
      %s55 = sshll.u32 %s3, 4
      %s56 = int_to_ptr.hbm [resolvable:$true] %s55
      %s57 = sshll.u32 [#allocation8], 4
      %s58 = int_to_ptr.vmem [resolvable:$true] %s57
      %63 = dma.hbm_to_vmem [thread:$0]  %s56, 4096, %s58, [#allocation9], 64, 64, 4
    $region17: #{tpu_custom_call.1} parent=1 // pred_fallthru
      _
    // Predicated region
    $region18: #{tpu_custom_call.1} parent=1 // pred_check
      _
    $region19: #{tpu_custom_call.1} parent=1 // pred_check_branch
      %65 = sbr.rel (0) target = $region21
    $region20: #{tpu_custom_call.1} parent=1 // pred_region
      _
    $region21: #{tpu_custom_call.1} parent=1 // pred_fallthru
      _
    // Predicated region
    $region22: #{tpu_custom_call.1} parent=1 // pred_check
      _
    $region23: #{tpu_custom_call.1} parent=1 // pred_check_branch
      %67 = sbr.rel (0) target = $region25
    $region24: #{tpu_custom_call.1} parent=1 // pred_region
      %69 = dma.done [#allocation3], 128
    $region25: #{tpu_custom_call.1} parent=1 // pred_fallthru
      _
    // Predicated region
    $region26: #{tpu_custom_call.1} parent=1 // pred_check
      _
    $region27: #{tpu_custom_call.1} parent=1 // pred_check_branch
      %71 = sbr.rel (0) target = $region29
    $region28: #{tpu_custom_call.1} parent=1 // pred_region
      %73 = dma.done [#allocation6], 4096
    $region29: #{tpu_custom_call.1} parent=1 // pred_fallthru
      _
    // Predicated region
    $region30: #{tpu_custom_call.1} parent=1 // pred_check
      _
    $region31: #{tpu_custom_call.1} parent=1 // pred_check_branch
      %75 = sbr.rel (0) target = $region33
    $region32: #{tpu_custom_call.1} parent=1 // pred_region
      %77 = dma.done [#allocation6], 64
    $region33: #{tpu_custom_call.1} parent=1 // pred_fallthru
      _
    // Predicated region
    $region34: #{tpu_custom_call.1} parent=1 // pred_check
      _
    $region35: #{tpu_custom_call.1} parent=1 // pred_check_branch
      %79 = sbr.rel (0) target = $region37
    $region36: #{tpu_custom_call.1} parent=1 // pred_region
      %81 = dma.done [#allocation9], 4096
    $region37: #{tpu_custom_call.1} parent=1 // pred_fallthru
      _
    %v82 = vld [vmem:[#allocation2] sm:$0xf]
    %v83 = vld [vmem:[#allocation2 + $0x4] sm:$0xf]
    %v84 = vld [vmem:[#allocation5] sm:$0xff]
    %v85 = vld [vmem:[#allocation5 + $0x8] sm:$0xff]
    %v86 = vld [vmem:[#allocation5 + $0x10] sm:$0xff]
    %v87 = vld [vmem:[#allocation5 + $0x18] sm:$0xff]
    %v88 = vld [vmem:[#allocation5 + $0x20] sm:$0xff]
    %v89 = vld [vmem:[#allocation5 + $0x28] sm:$0xff]
    %v90 = vld [vmem:[#allocation5 + $0x30] sm:$0xff]
    %v91 = vld [vmem:[#allocation5 + $0x38] sm:$0xff]
    %v92 = vld [vmem:[#allocation5 + $0x40] sm:$0xff]
    %v93 = vld [vmem:[#allocation5 + $0x48] sm:$0xff]
    %v94 = vld [vmem:[#allocation5 + $0x50] sm:$0xff]
    %v95 = vld [vmem:[#allocation5 + $0x58] sm:$0xff]
    %v96 = vld [vmem:[#allocation5 + $0x60] sm:$0xff]
    %v97 = vld [vmem:[#allocation5 + $0x68] sm:$0xff]
    %v98 = vld [vmem:[#allocation5 + $0x70] sm:$0xff]
    %v99 = vld [vmem:[#allocation5 + $0x78] sm:$0xff]
    %v100 = vld [vmem:[#allocation5 + $0x80] sm:$0xff]
    %v101 = vld [vmem:[#allocation5 + $0x88] sm:$0xff]
    %v102 = vld [vmem:[#allocation5 + $0x90] sm:$0xff]
    %v103 = vld [vmem:[#allocation5 + $0x98] sm:$0xff]
    %v104 = vld [vmem:[#allocation5 + $0xa0] sm:$0xff]
    %v105 = vld [vmem:[#allocation5 + $0xa8] sm:$0xff]
    %v106 = vld [vmem:[#allocation5 + $0xb0] sm:$0xff]
    %v107 = vld [vmem:[#allocation5 + $0xb8] sm:$0xff]
    %v108 = vld [vmem:[#allocation5 + $0xc0] sm:$0xff]
    %v109 = vld [vmem:[#allocation5 + $0xc8] sm:$0xff]
    %v110 = vld [vmem:[#allocation5 + $0xd0] sm:$0xff]
    %v111 = vld [vmem:[#allocation5 + $0xd8] sm:$0xff]
    %v112 = vld [vmem:[#allocation5 + $0xe0] sm:$0xff]
    %v113 = vld [vmem:[#allocation5 + $0xe8] sm:$0xff]
    %v114 = vld [vmem:[#allocation5 + $0xf0] sm:$0xff]
    %v115 = vld [vmem:[#allocation5 + $0xf8] sm:$0xff]
    %v116 = vld [vmem:[#allocation7] sm:$0xf]
    %v118 = vperm.slane %v116, 0
    %v119 = vperm.slane %v116, 1
    %v120 = vperm.slane %v116, 2
    %v121 = vperm.slane %v116, 3
    %v128 = vunpack.c.l.b16 %v82
    %v129 = vunpack.c.l.b16 %v83
    %v130 = vpack.c.b16 %v129, %v128
    %v164 = vunpack.c.l.b16 %v84
    %v165 = vunpack.c.h.b16 %v84
    %v166 = vunpack.c.l.b16 %v85
    %v167 = vunpack.c.h.b16 %v85
    %v168 = vunpack.c.l.b16 %v86
    %v169 = vunpack.c.h.b16 %v86
    %v170 = vunpack.c.l.b16 %v87
    %v171 = vunpack.c.h.b16 %v87
    %v172 = vunpack.c.l.b16 %v88
    %v173 = vunpack.c.h.b16 %v88
    %v174 = vunpack.c.l.b16 %v89
    %v175 = vunpack.c.h.b16 %v89
    %v176 = vunpack.c.l.b16 %v90
    %v177 = vunpack.c.h.b16 %v90
    %v178 = vunpack.c.l.b16 %v91
    %v179 = vunpack.c.h.b16 %v91
    %v180 = vunpack.c.l.b16 %v92
    %v181 = vunpack.c.h.b16 %v92
    %v182 = vunpack.c.l.b16 %v93
    %v183 = vunpack.c.h.b16 %v93
    %v184 = vunpack.c.l.b16 %v94
    %v185 = vunpack.c.h.b16 %v94
    %v186 = vunpack.c.l.b16 %v95
    %v187 = vunpack.c.h.b16 %v95
    %v188 = vunpack.c.l.b16 %v96
    %v189 = vunpack.c.h.b16 %v96
    %v190 = vunpack.c.l.b16 %v97
    %v191 = vunpack.c.h.b16 %v97
    %v192 = vunpack.c.l.b16 %v98
    %v193 = vunpack.c.h.b16 %v98
    %v194 = vunpack.c.l.b16 %v99
    %v195 = vunpack.c.h.b16 %v99
    %v196 = vunpack.c.l.b16 %v100
    %v197 = vunpack.c.h.b16 %v100
    %v198 = vunpack.c.l.b16 %v101
    %v199 = vunpack.c.h.b16 %v101
    %v200 = vunpack.c.l.b16 %v102
    %v201 = vunpack.c.h.b16 %v102
    %v202 = vunpack.c.l.b16 %v103
    %v203 = vunpack.c.h.b16 %v103
    %v204 = vunpack.c.l.b16 %v104
    %v205 = vunpack.c.h.b16 %v104
    %v206 = vunpack.c.l.b16 %v105
    %v207 = vunpack.c.h.b16 %v105
    %v208 = vunpack.c.l.b16 %v106
    %v209 = vunpack.c.h.b16 %v106
    %v210 = vunpack.c.l.b16 %v107
    %v211 = vunpack.c.h.b16 %v107
    %v212 = vunpack.c.l.b16 %v108
    %v213 = vunpack.c.h.b16 %v108
    %v214 = vunpack.c.l.b16 %v109
    %v215 = vunpack.c.h.b16 %v109
    %v216 = vunpack.c.l.b16 %v110
    %v217 = vunpack.c.h.b16 %v110
    %v218 = vunpack.c.l.b16 %v111
    %v219 = vunpack.c.h.b16 %v111
    %v220 = vunpack.c.l.b16 %v112
    %v221 = vunpack.c.h.b16 %v112
    %v222 = vunpack.c.l.b16 %v113
    %v223 = vunpack.c.h.b16 %v113
    %v224 = vunpack.c.l.b16 %v114
    %v225 = vunpack.c.h.b16 %v114
    %v226 = vunpack.c.l.b16 %v115
    %v227 = vunpack.c.h.b16 %v115
    %v228 = vpack.c.b16 %v168, %v164
    %v229 = vpack.c.b16 %v169, %v165
    %v230 = vpack.c.b16 %v170, %v166
    %v231 = vpack.c.b16 %v171, %v167
    %v232 = vpack.c.b16 %v176, %v172
    %v233 = vpack.c.b16 %v177, %v173
    %v234 = vpack.c.b16 %v178, %v174
    %v235 = vpack.c.b16 %v179, %v175
    %v236 = vpack.c.b16 %v184, %v180
    %v237 = vpack.c.b16 %v185, %v181
    %v238 = vpack.c.b16 %v186, %v182
    %v239 = vpack.c.b16 %v187, %v183
    %v240 = vpack.c.b16 %v192, %v188
    %v241 = vpack.c.b16 %v193, %v189
    %v242 = vpack.c.b16 %v194, %v190
    %v243 = vpack.c.b16 %v195, %v191
    %v244 = vpack.c.b16 %v200, %v196
    %v245 = vpack.c.b16 %v201, %v197
    %v246 = vpack.c.b16 %v202, %v198
    %v247 = vpack.c.b16 %v203, %v199
    %v248 = vpack.c.b16 %v208, %v204
    %v249 = vpack.c.b16 %v209, %v205
    %v250 = vpack.c.b16 %v210, %v206
    %v251 = vpack.c.b16 %v211, %v207
    %v252 = vpack.c.b16 %v216, %v212
    %v253 = vpack.c.b16 %v217, %v213
    %v254 = vpack.c.b16 %v218, %v214
    %v255 = vpack.c.b16 %v219, %v215
    %v256 = vpack.c.b16 %v224, %v220
    %v257 = vpack.c.b16 %v225, %v221
    %v258 = vpack.c.b16 %v226, %v222
    %v259 = vpack.c.b16 %v227, %v223
    %292 = vmatpush.bf16.msra.mxu0 %v256
    %293 = vmatpush.bf16.msra.mxu0 %v252
    %294 = vmatpush.bf16.msra.mxu0 %v248
    %295 = vmatpush.bf16.msra.mxu0 %v244
    %296 = vmatpush.bf16.msra.mxu0 %v240
    %297 = vmatpush.bf16.msra.mxu0 %v236
    %298 = vmatpush.bf16.msra.mxu0 %v232
    %299 = vmatpush.bf16.msra.mxu0 %v228
    %300 = vmatmul.bf16.gmra.mxu0 %v130
    %v301 = vpop.f32.mrf.mxu0
    %v302 = vadd.f32 %v118, %v301
    %v303 = vpop.f32.mrf.mxu0
    %v304 = vadd.f32 %v118, %v303
    %305 = vdwg.mxu0
    %306 = vmatpush.bf16.msra.mxu0 %v257
    %307 = vmatpush.bf16.msra.mxu0 %v253
    %308 = vmatpush.bf16.msra.mxu0 %v249
    %309 = vmatpush.bf16.msra.mxu0 %v245
    %310 = vmatpush.bf16.msra.mxu0 %v241
    %311 = vmatpush.bf16.msra.mxu0 %v237
    %312 = vmatpush.bf16.msra.mxu0 %v233
    %313 = vmatpush.bf16.msra.mxu0 %v229
    %314 = vmatmul.bf16.gmra.mxu0 %v130
    %v315 = vpop.f32.mrf.mxu0
    %v316 = vadd.f32 %v119, %v315
    %v317 = vpop.f32.mrf.mxu0
    %v318 = vadd.f32 %v119, %v317
    %319 = vdwg.mxu0
    %320 = vmatpush.bf16.msra.mxu0 %v258
    %321 = vmatpush.bf16.msra.mxu0 %v254
    %322 = vmatpush.bf16.msra.mxu0 %v250
    %323 = vmatpush.bf16.msra.mxu0 %v246
    %324 = vmatpush.bf16.msra.mxu0 %v242
    %325 = vmatpush.bf16.msra.mxu0 %v238
    %326 = vmatpush.bf16.msra.mxu0 %v234
    %327 = vmatpush.bf16.msra.mxu0 %v230
    %328 = vmatmul.bf16.gmra.mxu0 %v130
    %v329 = vpop.f32.mrf.mxu0
    %v330 = vadd.f32 %v120, %v329
    %v331 = vpop.f32.mrf.mxu0
    %v332 = vadd.f32 %v120, %v331
    %333 = vdwg.mxu0
    %334 = vmatpush.bf16.msra.mxu0 %v259
    %335 = vmatpush.bf16.msra.mxu0 %v255
    %336 = vmatpush.bf16.msra.mxu0 %v251
    %337 = vmatpush.bf16.msra.mxu0 %v247
    %338 = vmatpush.bf16.msra.mxu0 %v243
    %339 = vmatpush.bf16.msra.mxu0 %v239
    %340 = vmatpush.bf16.msra.mxu0 %v235
    %341 = vmatpush.bf16.msra.mxu0 %v231
    %342 = vmatmul.bf16.gmra.mxu0 %v130
    %v343 = vpop.f32.mrf.mxu0
    %v344 = vadd.f32 %v121, %v343
    %v345 = vpop.f32.mrf.mxu0
    %v346 = vadd.f32 %v121, %v345
    %347 = vdwg.mxu0
    %v348 = vmax.f32 %v302, 0.0
    %v349 = vmax.f32 %v316, 0.0
    %v350 = vmax.f32 %v330, 0.0
    %v351 = vmax.f32 %v344, 0.0
    %v352 = vmax.f32 %v304, 0.0
    %v353 = vmax.f32 %v318, 0.0
    %v354 = vmax.f32 %v332, 0.0
    %v355 = vmax.f32 %v346, 0.0
    %v356 = vpack.c.bf16 %v352, %v348
    %v357 = vpack.c.bf16 %v353, %v349
    %v358 = vpack.c.bf16 %v354, %v350
    %v359 = vpack.c.bf16 %v355, %v351
    %v360 = vld [vmem:[#allocation8] sm:$0xf]
    %v361 = vld [vmem:[#allocation8 + $0x4] sm:$0xf]
    %v362 = vld [vmem:[#allocation8 + $0x8] sm:$0xf]
    %v363 = vld [vmem:[#allocation8 + $0xc] sm:$0xf]
    %v364 = vld [vmem:[#allocation8 + $0x10] sm:$0xf]
    %v365 = vld [vmem:[#allocation8 + $0x14] sm:$0xf]
    %v366 = vld [vmem:[#allocation8 + $0x18] sm:$0xf]
    %v367 = vld [vmem:[#allocation8 + $0x1c] sm:$0xf]
    %v368 = vld [vmem:[#allocation8 + $0x20] sm:$0xf]
    %v369 = vld [vmem:[#allocation8 + $0x24] sm:$0xf]
    %v370 = vld [vmem:[#allocation8 + $0x28] sm:$0xf]
    %v371 = vld [vmem:[#allocation8 + $0x2c] sm:$0xf]
    %v372 = vld [vmem:[#allocation8 + $0x30] sm:$0xf]
    %v373 = vld [vmem:[#allocation8 + $0x34] sm:$0xf]
    %v374 = vld [vmem:[#allocation8 + $0x38] sm:$0xf]
    %v375 = vld [vmem:[#allocation8 + $0x3c] sm:$0xf]
    %v376 = vld [vmem:[#allocation8 + $0x40] sm:$0xf]
    %v377 = vld [vmem:[#allocation8 + $0x44] sm:$0xf]
    %v378 = vld [vmem:[#allocation8 + $0x48] sm:$0xf]
    %v379 = vld [vmem:[#allocation8 + $0x4c] sm:$0xf]
    %v380 = vld [vmem:[#allocation8 + $0x50] sm:$0xf]
    %v381 = vld [vmem:[#allocation8 + $0x54] sm:$0xf]
    %v382 = vld [vmem:[#allocation8 + $0x58] sm:$0xf]
    %v383 = vld [vmem:[#allocation8 + $0x5c] sm:$0xf]
    %v384 = vld [vmem:[#allocation8 + $0x60] sm:$0xf]
    %v385 = vld [vmem:[#allocation8 + $0x64] sm:$0xf]
    %v386 = vld [vmem:[#allocation8 + $0x68] sm:$0xf]
    %v387 = vld [vmem:[#allocation8 + $0x6c] sm:$0xf]
    %v388 = vld [vmem:[#allocation8 + $0x70] sm:$0xf]
    %v389 = vld [vmem:[#allocation8 + $0x74] sm:$0xf]
    %v390 = vld [vmem:[#allocation8 + $0x78] sm:$0xf]
    %v391 = vld [vmem:[#allocation8 + $0x7c] sm:$0xf]
    %v392 = vld [vmem:[#allocation8 + $0x80] sm:$0xf]
    %v393 = vld [vmem:[#allocation8 + $0x84] sm:$0xf]
    %v394 = vld [vmem:[#allocation8 + $0x88] sm:$0xf]
    %v395 = vld [vmem:[#allocation8 + $0x8c] sm:$0xf]
    %v396 = vld [vmem:[#allocation8 + $0x90] sm:$0xf]
    %v397 = vld [vmem:[#allocation8 + $0x94] sm:$0xf]
    %v398 = vld [vmem:[#allocation8 + $0x98] sm:$0xf]
    %v399 = vld [vmem:[#allocation8 + $0x9c] sm:$0xf]
    %v400 = vld [vmem:[#allocation8 + $0xa0] sm:$0xf]
    %v401 = vld [vmem:[#allocation8 + $0xa4] sm:$0xf]
    %v402 = vld [vmem:[#allocation8 + $0xa8] sm:$0xf]
    %v403 = vld [vmem:[#allocation8 + $0xac] sm:$0xf]
    %v404 = vld [vmem:[#allocation8 + $0xb0] sm:$0xf]
    %v405 = vld [vmem:[#allocation8 + $0xb4] sm:$0xf]
    %v406 = vld [vmem:[#allocation8 + $0xb8] sm:$0xf]
    %v407 = vld [vmem:[#allocation8 + $0xbc] sm:$0xf]
    %v408 = vld [vmem:[#allocation8 + $0xc0] sm:$0xf]
    %v409 = vld [vmem:[#allocation8 + $0xc4] sm:$0xf]
    %v410 = vld [vmem:[#allocation8 + $0xc8] sm:$0xf]
    %v411 = vld [vmem:[#allocation8 + $0xcc] sm:$0xf]
    %v412 = vld [vmem:[#allocation8 + $0xd0] sm:$0xf]
    %v413 = vld [vmem:[#allocation8 + $0xd4] sm:$0xf]
    %v414 = vld [vmem:[#allocation8 + $0xd8] sm:$0xf]
    %v415 = vld [vmem:[#allocation8 + $0xdc] sm:$0xf]
    %v416 = vld [vmem:[#allocation8 + $0xe0] sm:$0xf]
    %v417 = vld [vmem:[#allocation8 + $0xe4] sm:$0xf]
    %v418 = vld [vmem:[#allocation8 + $0xe8] sm:$0xf]
    %v419 = vld [vmem:[#allocation8 + $0xec] sm:$0xf]
    %v420 = vld [vmem:[#allocation8 + $0xf0] sm:$0xf]
    %v421 = vld [vmem:[#allocation8 + $0xf4] sm:$0xf]
    %v422 = vld [vmem:[#allocation8 + $0xf8] sm:$0xf]
    %v423 = vld [vmem:[#allocation8 + $0xfc] sm:$0xf]
    %v424 = vld [vmem:[%s4] sm:$0x1]
    %v426 = vperm.slane %v424, 0
    %v492 = vunpack.c.l.b16 %v360
    %v493 = vunpack.c.l.b16 %v361
    %v494 = vunpack.c.l.b16 %v362
    %v495 = vunpack.c.l.b16 %v363
    %v496 = vunpack.c.l.b16 %v364
    %v497 = vunpack.c.l.b16 %v365
    %v498 = vunpack.c.l.b16 %v366
    %v499 = vunpack.c.l.b16 %v367
    %v500 = vunpack.c.l.b16 %v368
    %v501 = vunpack.c.l.b16 %v369
    %v502 = vunpack.c.l.b16 %v370
    %v503 = vunpack.c.l.b16 %v371
    %v504 = vunpack.c.l.b16 %v372
    %v505 = vunpack.c.l.b16 %v373
    %v506 = vunpack.c.l.b16 %v374
    %v507 = vunpack.c.l.b16 %v375
    %v508 = vunpack.c.l.b16 %v376
    %v509 = vunpack.c.l.b16 %v377
    %v510 = vunpack.c.l.b16 %v378
    %v511 = vunpack.c.l.b16 %v379
    %v512 = vunpack.c.l.b16 %v380
    %v513 = vunpack.c.l.b16 %v381
    %v514 = vunpack.c.l.b16 %v382
    %v515 = vunpack.c.l.b16 %v383
    %v516 = vunpack.c.l.b16 %v384
    %v517 = vunpack.c.l.b16 %v385
    %v518 = vunpack.c.l.b16 %v386
    %v519 = vunpack.c.l.b16 %v387
    %v520 = vunpack.c.l.b16 %v388
    %v521 = vunpack.c.l.b16 %v389
    %v522 = vunpack.c.l.b16 %v390
    %v523 = vunpack.c.l.b16 %v391
    %v524 = vunpack.c.l.b16 %v392
    %v525 = vunpack.c.l.b16 %v393
    %v526 = vunpack.c.l.b16 %v394
    %v527 = vunpack.c.l.b16 %v395
    %v528 = vunpack.c.l.b16 %v396
    %v529 = vunpack.c.l.b16 %v397
    %v530 = vunpack.c.l.b16 %v398
    %v531 = vunpack.c.l.b16 %v399
    %v532 = vunpack.c.l.b16 %v400
    %v533 = vunpack.c.l.b16 %v401
    %v534 = vunpack.c.l.b16 %v402
    %v535 = vunpack.c.l.b16 %v403
    %v536 = vunpack.c.l.b16 %v404
    %v537 = vunpack.c.l.b16 %v405
    %v538 = vunpack.c.l.b16 %v406
    %v539 = vunpack.c.l.b16 %v407
    %v540 = vunpack.c.l.b16 %v408
    %v541 = vunpack.c.l.b16 %v409
    %v542 = vunpack.c.l.b16 %v410
    %v543 = vunpack.c.l.b16 %v411
    %v544 = vunpack.c.l.b16 %v412
    %v545 = vunpack.c.l.b16 %v413
    %v546 = vunpack.c.l.b16 %v414
    %v547 = vunpack.c.l.b16 %v415
    %v548 = vunpack.c.l.b16 %v416
    %v549 = vunpack.c.l.b16 %v417
    %v550 = vunpack.c.l.b16 %v418
    %v551 = vunpack.c.l.b16 %v419
    %v552 = vunpack.c.l.b16 %v420
    %v553 = vunpack.c.l.b16 %v421
    %v554 = vunpack.c.l.b16 %v422
    %v555 = vunpack.c.l.b16 %v423
    %v556 = vpack.c.b16 %v493, %v492
    %v557 = vpack.c.b16 %v495, %v494
    %v558 = vpack.c.b16 %v497, %v496
    %v559 = vpack.c.b16 %v499, %v498
    %v560 = vpack.c.b16 %v501, %v500
    %v561 = vpack.c.b16 %v503, %v502
    %v562 = vpack.c.b16 %v505, %v504
    %v563 = vpack.c.b16 %v507, %v506
    %v564 = vpack.c.b16 %v509, %v508
    %v565 = vpack.c.b16 %v511, %v510
    %v566 = vpack.c.b16 %v513, %v512
    %v567 = vpack.c.b16 %v515, %v514
    %v568 = vpack.c.b16 %v517, %v516
    %v569 = vpack.c.b16 %v519, %v518
    %v570 = vpack.c.b16 %v521, %v520
    %v571 = vpack.c.b16 %v523, %v522
    %v572 = vpack.c.b16 %v525, %v524
    %v573 = vpack.c.b16 %v527, %v526
    %v574 = vpack.c.b16 %v529, %v528
    %v575 = vpack.c.b16 %v531, %v530
    %v576 = vpack.c.b16 %v533, %v532
    %v577 = vpack.c.b16 %v535, %v534
    %v578 = vpack.c.b16 %v537, %v536
    %v579 = vpack.c.b16 %v539, %v538
    %v580 = vpack.c.b16 %v541, %v540
    %v581 = vpack.c.b16 %v543, %v542
    %v582 = vpack.c.b16 %v545, %v544
    %v583 = vpack.c.b16 %v547, %v546
    %v584 = vpack.c.b16 %v549, %v548
    %v585 = vpack.c.b16 %v551, %v550
    %v586 = vpack.c.b16 %v553, %v552
    %v587 = vpack.c.b16 %v555, %v554
    %620 = vmatpush.bf16.msra.mxu0 %v563
    %621 = vmatpush.bf16.msra.mxu0 %v562
    %622 = vmatpush.bf16.msra.mxu0 %v561
    %623 = vmatpush.bf16.msra.mxu0 %v560
    %624 = vmatpush.bf16.msra.mxu0 %v559
    %625 = vmatpush.bf16.msra.mxu0 %v558
    %626 = vmatpush.bf16.msra.mxu0 %v557
    %627 = vmatpush.bf16.msra.mxu0 %v556
    %628 = vmatmul.bf16.gmra.mxu0 %v356
    %v629 = vpop.f32.mrf.mxu0
    %v630 = vadd.f32 %v426, %v629
    %v631 = vpop.f32.mrf.mxu0
    %v632 = vadd.f32 %v426, %v631
    %633 = vdwg.mxu0
    %634 = vmatpush.bf16.msra.mxu0 %v571
    %635 = vmatpush.bf16.msra.mxu0 %v570
    %636 = vmatpush.bf16.msra.mxu0 %v569
    %637 = vmatpush.bf16.msra.mxu0 %v568
    %638 = vmatpush.bf16.msra.mxu0 %v567
    %639 = vmatpush.bf16.msra.mxu0 %v566
    %640 = vmatpush.bf16.msra.mxu0 %v565
    %641 = vmatpush.bf16.msra.mxu0 %v564
    %642 = vmatmul.bf16.gmra.mxu0 %v357
    %v643 = vpop.f32.mrf.mxu0
    %v644 = vadd.f32 %v630, %v643
    %v645 = vpop.f32.mrf.mxu0
    %v646 = vadd.f32 %v632, %v645
    %647 = vdwg.mxu0
    %648 = vmatpush.bf16.msra.mxu0 %v579
    %649 = vmatpush.bf16.msra.mxu0 %v578
    %650 = vmatpush.bf16.msra.mxu0 %v577
    %651 = vmatpush.bf16.msra.mxu0 %v576
    %652 = vmatpush.bf16.msra.mxu0 %v575
    %653 = vmatpush.bf16.msra.mxu0 %v574
    %654 = vmatpush.bf16.msra.mxu0 %v573
    %655 = vmatpush.bf16.msra.mxu0 %v572
    %656 = vmatmul.bf16.gmra.mxu0 %v358
    %v657 = vpop.f32.mrf.mxu0
    %v658 = vadd.f32 %v644, %v657
    %v659 = vpop.f32.mrf.mxu0
    %v660 = vadd.f32 %v646, %v659
    %661 = vdwg.mxu0
    %662 = vmatpush.bf16.msra.mxu0 %v587
    %663 = vmatpush.bf16.msra.mxu0 %v586
    %664 = vmatpush.bf16.msra.mxu0 %v585
    %665 = vmatpush.bf16.msra.mxu0 %v584
    %666 = vmatpush.bf16.msra.mxu0 %v583
    %667 = vmatpush.bf16.msra.mxu0 %v582
    %668 = vmatpush.bf16.msra.mxu0 %v581
    %669 = vmatpush.bf16.msra.mxu0 %v580
    %670 = vmatmul.bf16.gmra.mxu0 %v359
    %v671 = vpop.f32.mrf.mxu0
    %v672 = vadd.f32 %v658, %v671
    %v673 = vpop.f32.mrf.mxu0
    %v674 = vadd.f32 %v660, %v673
    %675 = vdwg.mxu0
    %676 = vst [vmem:[#allocation10] sm:$0xff] %v672
    %677 = vst [vmem:[#allocation10 + $0x8] sm:$0xff] %v674
    // Predicated region
    $region38: #{tpu_custom_call.1} parent=1 // pred_check
      _
    $region39: #{tpu_custom_call.1} parent=1 // pred_check_branch
      %679 = sbr.rel (0) target = $region41
    $region40: #{tpu_custom_call.1} parent=1 // pred_region
      %681 = vsyncadd [#allocation4], 0
      %s682 = sshll.u32 [#allocation10], 4
      %s683 = int_to_ptr.vmem [resolvable:$true] %s682
      %s684 = sshll.u32 %s5, 4
      %s685 = int_to_ptr.hbm [resolvable:$true] %s684
      %690 = dma.vmem_to_hbm [thread:$0]  %s683, 256, %s685, [#allocation4], 128, 128, 8
    $region41: #{tpu_custom_call.1} parent=1 // pred_fallthru
      _
    // Predicated region
    $region42: #{tpu_custom_call.1} parent=1 // pred_check
      _
    $region43: #{tpu_custom_call.1} parent=1 // pred_check_branch
      %692 = sbr.rel (0) target = $region45
    $region44: #{tpu_custom_call.1} parent=1 // pred_region
      %694 = dma.done [#allocation4], 256
    $region45: #{tpu_custom_call.1} parent=1 // pred_fallthru
      _
    %695 = vsyncpa [#allocation3], 1
    %696 = vsyncpa [#allocation6], 1
    %697 = vsyncpa [#allocation9], 1
    %698 = vsyncpa [#allocation4], 1

</llo_original>
